<compile_context>
chip_gen: v5e
topology: v5e:2x2
jax: 0.10.0
libtpu: 0.0.40
codegen_flags: <defaults>
</compile_context>

<pallas_src>
import functools
from typing import Dict, List, Optional, Tuple

import jax
import jax.numpy as jnp
from jax.experimental import pallas as pl
from jax.experimental.pallas import tpu as pltpu


def _round_up(x: int, m: int) -> int:
    return ((x + m - 1) // m) * m


# --------------------------------------------------------------------------
# Fused kernel: LayerNorm(C) + Linear(C->hidden) + concatenated heads, with one
# lane-dense output per head.
# --------------------------------------------------------------------------
def _fused_translator_kernel(x_ref, gamma_ref, beta_ref, wa_ref, ba_ref,
                             wh_ref, bh_ref, *out_refs,
                             head_cols, compute_dtype):
    # --- LayerNorm over channels: single-pass statistics (var = E[x^2] - mu^2),
    #     halving the cross-lane XLU reduction passes.  Ragged last-block rows
    #     may contain garbage; they only produce garbage rows that Pallas masks
    #     out on store, so no clamping beyond the eps is needed for validity. ---
    x = x_ref[...].astype(jnp.float32)
    mu = jnp.mean(x, axis=-1, keepdims=True)
    ms = jnp.mean(x * x, axis=-1, keepdims=True)
    var = jnp.maximum(ms - mu * mu, 0.0)          # biased var (PyTorch LN)
    xn = (x - mu) * jax.lax.rsqrt(var + 1e-5)     # PyTorch LN eps default
    xn = xn * gamma_ref[...] + beta_ref[...]

    # --- Adapter matmul: bf16 MXU operands, f32 accumulation.  `h` stays in
    #     VMEM/vregs for this tile (no HBM round-trip). ---
    h = jnp.dot(xn.astype(compute_dtype), wa_ref[...],
                preferred_element_type=jnp.float32) + ba_ref[...]

    # --- translator_stem = Identity. ---

    # --- All heads fused into one lane-dense [hidden, D_slab] matmul. ---
    y = jnp.dot(h.astype(compute_dtype), wh_ref[...],
                preferred_element_type=jnp.float32) + bh_ref[...]

    # --- Write each head directly: static, 128-aligned lane slices of y. ---
    for o_ref, (off, width) in zip(out_refs, head_cols):
        o_ref[...] = y[:, off:off + width].astype(o_ref.dtype)


# --------------------------------------------------------------------------
# Pallas wrapper: 1-D grid over M, resident (single-buffered) weights, streamed
# activations, per-head outputs.
# --------------------------------------------------------------------------
def fused_translator_pallas(x2d, gamma, beta, wa, ba, wh, bh,
                            head_cols: Tuple[Tuple[int, int], ...], *,
                            tile_m: int = 256,
                            compute_dtype=jnp.bfloat16,
                            out_dtype=jnp.bfloat16):
    M, C = x2d.shape
    H = wa.shape[1]
    Dslab = wh.shape[1]                      # 256-aligned concatenated head width

    # M tile: multiple of 8 sublanes; capped at ~M/2 so the grid has >=2 steps
    # (lets "parallel" shard the M axis across both TensorCores on v7x).
    tm = max(8, min(_round_up(tile_m, 8), _round_up(pl.cdiv(M, 2), 8)))
    grid = (pl.cdiv(M, tm),)                 # ragged last block handled by Pallas

    out_shapes = tuple(jax.ShapeDtypeStruct((M, w), out_dtype) for _, w in head_cols)
    out_specs = tuple(pl.BlockSpec((tm, w), lambda i: (i, 0)) for _, w in head_cols)

    def _resident(shape):
        # Grid-invariant operand: constant index_map + single-buffered so the
        # resident weight slabs are not duplicated in VMEM.
        return pl.BlockSpec(shape, lambda i: (0, 0), pipeline_mode=pl.Buffered(1))

    # Explicit scoped-VMEM budget: resident weights (single buffer) + streamed
    # x / per-head output tiles (double-buffered) + f32 temporaries, ~25% headroom,
    # clamped to [32 MiB, 64 MiB] so it is valid on v5e/v6e/v7x alike.
    cbytes = jnp.dtype(compute_dtype).itemsize
    obytes = jnp.dtype(out_dtype).itemsize
    xbytes = jnp.dtype(x2d.dtype).itemsize
    sum_out = sum(w for _, w in head_cols)
    resident_bytes = (C * H + H * Dslab) * cbytes + (2 * C + H + Dslab) * 4
    streamed_bytes = 2 * tm * C * xbytes + 2 * tm * sum_out * obytes
    temp_bytes = tm * (2 * C + H + Dslab) * 4
    need = resident_bytes + streamed_bytes + temp_bytes
    vmem_limit = int(min(max(need * 1.25, 32 * 1024 * 1024), 64 * 1024 * 1024))

    cost = pl.CostEstimate(
        flops=2 * M * C * H + 2 * M * H * Dslab + 8 * M * C,
        transcendentals=M,
        bytes_accessed=(M * C * xbytes + M * sum_out * obytes
                        + (C * H + H * Dslab) * cbytes
                        + (2 * C + H + Dslab) * 4),
    )

    kernel = functools.partial(_fused_translator_kernel,
                               head_cols=tuple(head_cols),
                               compute_dtype=compute_dtype)

    return pl.pallas_call(
        kernel,
        out_shape=out_shapes,
        grid_spec=pltpu.PrefetchScalarGridSpec(
            num_scalar_prefetch=0,
            grid=grid,
            in_specs=[
                pl.BlockSpec((tm, C), lambda i: (i, 0)),   # x tile (streamed over M)
                _resident((1, C)),                         # LN gamma
                _resident((1, C)),                         # LN beta
                _resident((C, H)),                         # adapter W
                _resident((1, H)),                         # adapter b
                _resident((H, Dslab)),                     # concatenated head W slab
                _resident((1, Dslab)),                     # concatenated head b slab
            ],
            out_specs=out_specs,
        ),
        compiler_params=pltpu.CompilerParams(
            dimension_semantics=("parallel",),             # shard M across TCs (v7x)
            vmem_limit_bytes=vmem_limit),
        cost_estimate=cost,
    )(x2d, gamma, beta, wa, ba, wh, bh)


# --------------------------------------------------------------------------
# FeatureTranslator (JAX / Pallas)
# --------------------------------------------------------------------------
class FeatureTranslatorPallas:
    def __init__(self,
                 target_model_names: List[str],
                 input_size: Tuple[int, int, int, int],
                 target_feature_dims: Dict[str, int],
                 translator_hidden_size: int = 1024,
                 key: Optional[jax.Array] = None,
                 compute_dtype=jnp.bfloat16,
                 out_dtype=jnp.bfloat16):
        self.input_channel = input_size[-1]
        self.translator_hidden_size = translator_hidden_size
        self.target_model_names = list(target_model_names)
        self.input_size = input_size
        self.compute_dtype = compute_dtype
        self.out_dtype = out_dtype            # bf16 outputs; upcast outside if needed

        key = jax.random.PRNGKey(0) if key is None else key
        k_adapt, k_heads = jax.random.split(key)

        C, Hd = self.input_channel, self.translator_hidden_size
        # backbone_adapter = LayerNorm(C) + Linear(C, hidden)
        self.ln_gamma = jnp.ones((1, C), jnp.float32)
        self.ln_beta = jnp.zeros((1, C), jnp.float32)
        bound = 1.0 / (C ** 0.5)
        kw, kb = jax.random.split(k_adapt)
        self.adapter_w = jax.random.uniform(
            kw, (C, Hd), jnp.float32, -bound, bound).astype(compute_dtype)
        self.adapter_b = jax.random.uniform(kb, (1, Hd), jnp.float32, -bound, bound)

        # translator_stem = Identity
        # translator_heads[t] = Linear(hidden, D_t); each head occupies a
        # 128-aligned, 128-multiple-wide column range of one weight slab whose
        # total width is 256-aligned (v6e/v7x MXU).
        hb = 1.0 / (Hd ** 0.5)
        ws, bs = [], []
        self.head_layout: Dict[str, Tuple[int, int, int]] = {}   # name -> (off, Dp, D)
        off = 0
        for i, t in enumerate(self.target_model_names):
            D = target_feature_dims[t]
            Dp = max(_round_up(D, 128), 128)
            kw, kb = jax.random.split(jax.random.fold_in(k_heads, i))
            w = jax.random.uniform(kw, (Hd, D), jnp.float32, -hb, hb)
            b = jax.random.uniform(kb, (1, D), jnp.float32, -hb, hb)
            ws.append(jnp.pad(w, ((0, 0), (0, Dp - D))))
            bs.append(jnp.pad(b, ((0, 0), (0, Dp - D))))
            self.head_layout[t] = (off, Dp, D)
            off += Dp
        d_slab = max(_round_up(off, 256), 256)
        w_cat = jnp.concatenate(ws, axis=1)
        b_cat = jnp.concatenate(bs, axis=1)
        if d_slab != off:
            w_cat = jnp.pad(w_cat, ((0, 0), (0, d_slab - off)))
            b_cat = jnp.pad(b_cat, ((0, 0), (0, d_slab - off)))
        self.heads_w = w_cat.astype(compute_dtype)
        self.heads_b = b_cat.astype(jnp.float32)

    def __call__(self, x: jax.Array,
                 target_model_names: Optional[List[str]] = None) -> Dict[str, jax.Array]:
        """x: [B, (1)+H*W, C] -> dict of [B, (1)+H*W, D_t] (out_dtype, default bf16)."""
        B, T, C = x.shape
        x2d = x.reshape(B * T, C)                       # metadata-only reshape
        # All heads are computed in one fused call; if only a subset is requested
        # the full slab is still computed (extra FLOPs only, outputs identical).
        head_cols = tuple((self.head_layout[t][0], self.head_layout[t][1])
                          for t in self.target_model_names)
        outs = fused_translator_pallas(
            x2d, self.ln_gamma, self.ln_beta,
            self.adapter_w, self.adapter_b,
            self.heads_w, self.heads_b,
            head_cols,
            compute_dtype=self.compute_dtype, out_dtype=self.out_dtype)

        names = target_model_names if target_model_names is not None else self.target_model_names
        feats = {}
        for t in names:
            idx = self.target_model_names.index(t)
            off, Dp, D = self.head_layout[t]
            y = outs[idx]
            if D != Dp:                                  # unpad only if D_t % 128 != 0
                y = y[:, :D]
            feats[t] = y.reshape(B, T, D)
        return feats


# --------------------------------------------------------------------------
# Reference (pure JAX, same bf16-operand / f32-accumulate recipe) for checking
# --------------------------------------------------------------------------
def _reference_forward(model: FeatureTranslatorPallas, x):
    B, T, C = x.shape
    x2d = x.reshape(B * T, C).astype(jnp.float32)
    mu = jnp.mean(x2d, axis=-1, keepdims=True)
    var = jnp.mean((x2d - mu) ** 2, axis=-1, keepdims=True)
    xn = (x2d - mu) * jax.lax.rsqrt(var + 1e-5)
    xn = xn * model.ln_gamma + model.ln_beta
    h = jnp.dot(xn.astype(model.compute_dtype), model.adapter_w,
                preferred_element_type=jnp.float32) + model.adapter_b
    y = jnp.dot(h.astype(model.compute_dtype), model.heads_w,
                preferred_element_type=jnp.float32) + model.heads_b
    out = {}
    for t, (off, Dp, D) in model.head_layout.items():
        out[t] = y[:, off:off + D].reshape(B, T, D)
    return out


if __name__ == "__main__":
    key = jax.random.PRNGKey(0)
    k_x, k_p = jax.random.split(key)

    # Small shapes consistent with the module: B=2, tokens = 1 (CLS) + 4*4, C=32.
    B, Hp, Wp, C = 2, 4, 4, 32
    T = 1 + Hp * Wp                      # 17 -> M = 34 (exercises the ragged block)
    hidden = 64
    target_dims = {"dinov2": 48, "clip": 80}

    x = jax.random.normal(k_x, (B, T, C), jnp.float32)

    model = FeatureTranslatorPallas(
        target_model_names=list(target_dims.keys()),
        input_size=(B, Hp, Wp, C),
        target_feature_dims=target_dims,
        translator_hidden_size=hidden,
        key=k_p,
    )

    feats = model(x)
    jax.block_until_ready(feats)

    ref = _reference_forward(model, x)
    for t in target_dims:
        assert feats[t].shape == (B, T, target_dims[t]), feats[t].shape
        # bf16 MXU operands + bf16 output store: compare against the matching
        # bf16-operand f32-accumulate reference with loosened tolerance.
        got = feats[t].astype(jnp.float32)
        assert jnp.allclose(got, ref[t], atol=5e-2, rtol=5e-2), t

    print("KERNEL_OK")
</pallas_src>

<mosaic_0001>
module attributes {stable_mosaic.version = 11 : i64} {
  func.func @_fused_translator_kernel(%arg0: i32, %arg1: memref<24x32xf32, #tpu.memory_space<vmem>>, %arg2: memref<1x32xf32, #tpu.memory_space<vmem>>, %arg3: memref<1x32xf32, #tpu.memory_space<vmem>>, %arg4: memref<32x64xbf16, #tpu.memory_space<vmem>>, %arg5: memref<1x64xf32, #tpu.memory_space<vmem>>, %arg6: memref<64x256xbf16, #tpu.memory_space<vmem>>, %arg7: memref<1x256xf32, #tpu.memory_space<vmem>>, %arg8: memref<24x128xbf16, #tpu.memory_space<vmem>>, %arg9: memref<24x128xbf16, #tpu.memory_space<vmem>>) attributes {dimension_semantics = [#tpu.dimension_semantics<parallel>], iteration_bounds = array<i64: 2>, scalar_prefetch = 0 : i64, scratch_operands = 0 : i64, tpu.core_type = #tpu.core_type<tc>, window_params = [{transform_indices = @transform_0, window_bounds = array<i64: 24, 32>}, {pipeline_mode = #tpu.pipeline_mode<synchronous>, transform_indices = @transform_1, window_bounds = array<i64: 1, 32>}, {pipeline_mode = #tpu.pipeline_mode<synchronous>, transform_indices = @transform_2, window_bounds = array<i64: 1, 32>}, {pipeline_mode = #tpu.pipeline_mode<synchronous>, transform_indices = @transform_3, window_bounds = array<i64: 32, 64>}, {pipeline_mode = #tpu.pipeline_mode<synchronous>, transform_indices = @transform_4, window_bounds = array<i64: 1, 64>}, {pipeline_mode = #tpu.pipeline_mode<synchronous>, transform_indices = @transform_5, window_bounds = array<i64: 64, 256>}, {pipeline_mode = #tpu.pipeline_mode<synchronous>, transform_indices = @transform_6, window_bounds = array<i64: 1, 256>}, {transform_indices = @transform_7, window_bounds = array<i64: 24, 128>}, {transform_indices = @transform_8, window_bounds = array<i64: 24, 128>}]} {
    %c0 = arith.constant 0 : index
    %c0_0 = arith.constant 0 : index
    %0 = vector.load %arg1[%c0, %c0_0] : memref<24x32xf32, #tpu.memory_space<vmem>>, vector<24x32xf32>
    %cst = arith.constant dense<0.000000e+00> : vector<24xf32>
    %1 = vector.multi_reduction <add>, %0, %cst [1] : vector<24x32xf32> to vector<24xf32>
    %2 = vector.shape_cast %1 : vector<24xf32> to vector<24x1xf32>
    %cst_1 = arith.constant 3.200000e+01 : f32
    %3 = vector.broadcast %cst_1 : f32 to vector<24x1xf32>
    %4 = arith.divf %2, %3 : vector<24x1xf32>
    %5 = arith.mulf %0, %0 : vector<24x32xf32>
    %cst_2 = arith.constant dense<0.000000e+00> : vector<24xf32>
    %6 = vector.multi_reduction <add>, %5, %cst_2 [1] : vector<24x32xf32> to vector<24xf32>
    %7 = vector.shape_cast %6 : vector<24xf32> to vector<24x1xf32>
    %cst_3 = arith.constant 3.200000e+01 : f32
    %8 = vector.broadcast %cst_3 : f32 to vector<24x1xf32>
    %9 = arith.divf %7, %8 : vector<24x1xf32>
    %10 = arith.mulf %4, %4 : vector<24x1xf32>
    %11 = arith.subf %9, %10 : vector<24x1xf32>
    %cst_4 = arith.constant 0.000000e+00 : f32
    %12 = vector.broadcast %cst_4 : f32 to vector<24x1xf32>
    %13 = arith.maximumf %11, %12 : vector<24x1xf32>
    %14 = vector.broadcast %4 : vector<24x1xf32> to vector<24x32xf32>
    %15 = arith.subf %0, %14 : vector<24x32xf32>
    %cst_5 = arith.constant 9.99999974E-6 : f32
    %16 = vector.broadcast %cst_5 : f32 to vector<24x1xf32>
    %17 = arith.addf %13, %16 : vector<24x1xf32>
    %18 = math.rsqrt %17 : vector<24x1xf32>
    %19 = vector.broadcast %18 : vector<24x1xf32> to vector<24x32xf32>
    %20 = arith.mulf %15, %19 : vector<24x32xf32>
    %c0_6 = arith.constant 0 : index
    %c0_7 = arith.constant 0 : index
    %21 = vector.load %arg2[%c0_6, %c0_7] : memref<1x32xf32, #tpu.memory_space<vmem>>, vector<1x32xf32>
    %22 = vector.broadcast %21 : vector<1x32xf32> to vector<24x32xf32>
    %23 = arith.mulf %20, %22 : vector<24x32xf32>
    %c0_8 = arith.constant 0 : index
    %c0_9 = arith.constant 0 : index
    %24 = vector.load %arg3[%c0_8, %c0_9] : memref<1x32xf32, #tpu.memory_space<vmem>>, vector<1x32xf32>
    %25 = vector.broadcast %24 : vector<1x32xf32> to vector<24x32xf32>
    %26 = arith.addf %23, %25 : vector<24x32xf32>
    %27 = arith.truncf %26 : vector<24x32xf32> to vector<24x32xbf16>
    %c0_10 = arith.constant 0 : index
    %c0_11 = arith.constant 0 : index
    %28 = vector.load %arg4[%c0_10, %c0_11] : memref<32x64xbf16, #tpu.memory_space<vmem>>, vector<32x64xbf16>
    %cst_12 = arith.constant dense<0.000000e+00> : vector<24x64xf32>
    %29 = tpu.matmul %27, %28, %cst_12 {dimension_numbers = #tpu.dot_dimension_numbers<[1], [0], [0], [1], [0, 0, 1, 1], [], []>} : vector<24x32xbf16>, vector<32x64xbf16>, vector<24x64xf32> -> vector<24x64xf32>
    %c0_13 = arith.constant 0 : index
    %c0_14 = arith.constant 0 : index
    %30 = vector.load %arg5[%c0_13, %c0_14] : memref<1x64xf32, #tpu.memory_space<vmem>>, vector<1x64xf32>
    %31 = vector.broadcast %30 : vector<1x64xf32> to vector<24x64xf32>
    %32 = arith.addf %29, %31 : vector<24x64xf32>
    %33 = arith.truncf %32 : vector<24x64xf32> to vector<24x64xbf16>
    %c0_15 = arith.constant 0 : index
    %c0_16 = arith.constant 0 : index
    %34 = vector.load %arg6[%c0_15, %c0_16] : memref<64x256xbf16, #tpu.memory_space<vmem>>, vector<64x256xbf16>
    %cst_17 = arith.constant dense<0.000000e+00> : vector<24x256xf32>
    %35 = tpu.matmul %33, %34, %cst_17 {dimension_numbers = #tpu.dot_dimension_numbers<[1], [0], [0], [1], [0, 0, 1, 1], [], []>} : vector<24x64xbf16>, vector<64x256xbf16>, vector<24x256xf32> -> vector<24x256xf32>
    %c0_18 = arith.constant 0 : index
    %c0_19 = arith.constant 0 : index
    %36 = vector.load %arg7[%c0_18, %c0_19] : memref<1x256xf32, #tpu.memory_space<vmem>>, vector<1x256xf32>
    %37 = vector.broadcast %36 : vector<1x256xf32> to vector<24x256xf32>
    %38 = arith.addf %35, %37 : vector<24x256xf32>
    %39 = vector.extract_strided_slice %38 {offsets = [0, 0], sizes = [24, 128], strides = [1, 1]} : vector<24x256xf32> to vector<24x128xf32>
    %40 = arith.truncf %39 : vector<24x128xf32> to vector<24x128xbf16>
    %c0_20 = arith.constant 0 : index
    %c0_21 = arith.constant 0 : index
    %41 = vector.load %arg8[%c0_20, %c0_21] : memref<24x128xbf16, #tpu.memory_space<vmem>>, vector<24x128xbf16>
    tpu.vector_store %arg8[%c0_20, %c0_21], %40 {strides = array<i32>} : memref<24x128xbf16, #tpu.memory_space<vmem>>, vector<24x128xbf16>,
    %42 = vector.extract_strided_slice %38 {offsets = [0, 128], sizes = [24, 128], strides = [1, 1]} : vector<24x256xf32> to vector<24x128xf32>
    %43 = arith.truncf %42 : vector<24x128xf32> to vector<24x128xbf16>
    %c0_22 = arith.constant 0 : index
    %c0_23 = arith.constant 0 : index
    %44 = vector.load %arg9[%c0_22, %c0_23] : memref<24x128xbf16, #tpu.memory_space<vmem>>, vector<24x128xbf16>
    tpu.vector_store %arg9[%c0_22, %c0_23], %43 {strides = array<i32>} : memref<24x128xbf16, #tpu.memory_space<vmem>>, vector<24x128xbf16>,
    return
  }
  func.func @transform_0(%arg0: i32) -> (i32, i32) {
    %c0_i32 = arith.constant 0 : i32
    %c0_i32_0 = arith.constant 0 : i32
    return %arg0, %c0_i32 : i32, i32
  }
  func.func @transform_1(%arg0: i32) -> (i32, i32) {
    %c0_i32 = arith.constant 0 : i32
    %c0_i32_0 = arith.constant 0 : i32
    %c0_i32_1 = arith.constant 0 : i32
    return %c0_i32, %c0_i32_0 : i32, i32
  }
  func.func @transform_2(%arg0: i32) -> (i32, i32) {
    %c0_i32 = arith.constant 0 : i32
    %c0_i32_0 = arith.constant 0 : i32
    %c0_i32_1 = arith.constant 0 : i32
    return %c0_i32, %c0_i32_0 : i32, i32
  }
  func.func @transform_3(%arg0: i32) -> (i32, i32) {
    %c0_i32 = arith.constant 0 : i32
    %c0_i32_0 = arith.constant 0 : i32
    %c0_i32_1 = arith.constant 0 : i32
    return %c0_i32, %c0_i32_0 : i32, i32
  }
  func.func @transform_4(%arg0: i32) -> (i32, i32) {
    %c0_i32 = arith.constant 0 : i32
    %c0_i32_0 = arith.constant 0 : i32
    %c0_i32_1 = arith.constant 0 : i32
    return %c0_i32, %c0_i32_0 : i32, i32
  }
  func.func @transform_5(%arg0: i32) -> (i32, i32) {
    %c0_i32 = arith.constant 0 : i32
    %c0_i32_0 = arith.constant 0 : i32
    %c0_i32_1 = arith.constant 0 : i32
    return %c0_i32, %c0_i32_0 : i32, i32
  }
  func.func @transform_6(%arg0: i32) -> (i32, i32) {
    %c0_i32 = arith.constant 0 : i32
    %c0_i32_0 = arith.constant 0 : i32
    %c0_i32_1 = arith.constant 0 : i32
    return %c0_i32, %c0_i32_0 : i32, i32
  }
  func.func @transform_7(%arg0: i32) -> (i32, i32) {
    %c0_i32 = arith.constant 0 : i32
    %c0_i32_0 = arith.constant 0 : i32
    return %arg0, %c0_i32 : i32, i32
  }
  func.func @transform_8(%arg0: i32) -> (i32, i32) {
    %c0_i32 = arith.constant 0 : i32
    %c0_i32_0 = arith.constant 0 : i32
    return %arg0, %c0_i32 : i32, i32
  }
}

</mosaic_0001>

<llo_original>
// kernel: tpu_custom_call.1
$region0: #{tpu_custom_call.1}
  #allocation0 [shape = 'u32[]', space=smem, size = 0x4, offset = 0x4, fixed_abs, tag = 'smem constant byte address 0x4 - core index']
  #allocation1 [shape = 'u32[72,128]{1,0:T(1,128)}', space=vmem, size = 0x9000, scoped, tag = 'internal scratch']
  %s0 = inlined_call_operand.vmem [shape: f32[34,32], index: 0, kind: input, shape index: {}]
  %s1 = inlined_call_operand.vmem [shape: f32[1,32], index: 1, kind: input, shape index: {}]
  %s2 = inlined_call_operand.vmem [shape: f32[1,32], index: 2, kind: input, shape index: {}]
  %s3 = inlined_call_operand.hbm [shape: bf16[32,64], index: 3, kind: input, shape index: {}]
  %s4 = inlined_call_operand.vmem [shape: f32[1,64], index: 4, kind: input, shape index: {}]
  %s5 = inlined_call_operand.vmem [shape: bf16[64,256], index: 5, kind: input, shape index: {}]
  %s6 = inlined_call_operand.vmem [shape: f32[1,256], index: 6, kind: input, shape index: {}]
  %s7 = inlined_call_operand.hbm [shape: bf16[34,128], index: 7, kind: output, shape index: {0}]
  %s8 = inlined_call_operand.hbm [shape: bf16[34,128], index: 8, kind: output, shape index: {1}]
  %9 = xla_tuple %s7, %s8
  %s10 = sld [smem:[#allocation0]]
  $region73: #{tpu_custom_call.1} parent=0
    _
  %s12 = ssub.s32 1, %s10
  %s13 = scalar_select 0, %s12, %s10
  $region1: #{tpu_custom_call.1} parent=0
    #allocation2 [shape = 'u8[8192]{0}', space=vmem, size = 0x2000, scoped, tag = 'input window, operand 3, single buffered']
    #allocation3 [shape = 's32[2]{0}', space=sflag, size = 0x8, scoped, tag = 'scoped memory for tpu_custom_call.1']
    #allocation4 [shape = 's32[2]{0}', space=sflag, size = 0x8, scoped, tag = 'scoped memory for tpu_custom_call.1']
    #allocation5 [shape = 'u8[12288]{0}', space=vmem, size = 0x3000, scoped, tag = 'output window, operand 0']
    #allocation6 [shape = 'u8[12288]{0}', space=vmem, size = 0x3000, scoped, tag = 'output window, operand 1']
    #allocation7 [shape = 's32[2]{0}', space=sflag, size = 0x8, scoped, tag = 'scoped memory for tpu_custom_call.1']
    %14 = vsyncpa [#allocation3], 0
    %15 = vsyncpa [#allocation4], 0
    %s16 = scalar_lea.sflag [#allocation4], 1
    %17 = vsyncpa %s16, 0
    %18 = vsyncpa [#allocation7], 0
    %s19 = scalar_lea.sflag [#allocation7], 1
    %20 = vsyncpa %s19, 0
    loop: start=0, step=1, limit=4
    $region2: #{tpu_custom_call.1} parent=1 // loop_pre_header
      _
    $region3: #{tpu_custom_call.1} parent=1 // loop_header
      %s22 = sphi 0, %s26
      %p23 = scmp.ge.s32.totalorder %s22, 4
      %s32 = sphi 0, %s34
      %s35 = sphi 0, %s32
      %s36 = sphi 0, %s35
      %s52 = sphi 0, %s36
      %s56 = sphi 0, %s56
      %s58 = sphi 0, %s56
      %s59 = sphi 0, %s58
      %s73 = sphi 0, %s59
      %s77 = sphi 0, %s77
      %s79 = sphi 0, %s77
      %s80 = sphi 0, %s79
      %s94 = sphi 0, %s80
      %s98 = sphi 0, %s98
      %s100 = sphi 0, %s98
      %s101 = sphi 0, %s100
      %s115 = sphi 0, %s101
      %s119 = sphi 0, %s119
      %s121 = sphi 0, %s119
      %s122 = sphi 0, %s121
      %s136 = sphi 0, %s122
      %s140 = sphi 0, %s140
      %s142 = sphi 0, %s140
      %s143 = sphi 0, %s142
      %s157 = sphi 0, %s143
      %s161 = sphi 0, %s161
      %s163 = sphi 0, %s161
      %s164 = sphi 0, %s163
      %s178 = sphi 0, %s164
      %s184 = sphi 0, %s186
      %s187 = sphi 0, %s184
      %s188 = sphi 0, %s187
      %s204 = sphi 0, %s188
      %s210 = sphi 0, %s212
      %s213 = sphi 0, %s210
      %s214 = sphi 0, %s213
      %s230 = sphi 0, %s214
    $region4: #{tpu_custom_call.1} parent=1 // loop_header_branch
      %25 = sbr.rel (%p23) target = $region8
    $region5: #{tpu_custom_call.1} parent=1 // loop_body
      %s27 = ssub.s32 %s22, 1
      %s28 = ssub.s32 %s22, 2
      %s29 = sadd.s32 %s22, 1
      %s30 = ssub.s32 %s22, %s29
      %p31 = scmp.eq.s32.totalorder %s30, 0
      %s33 = sadd.s32 %s32, 1
      %s34 = scalar_select %p31, %s32, %s33
      %p37 = pneg %p31
      %p38 = scmp.eq.s32.totalorder %s22, 1
      %p39 = por %p37, %p38
      %p40 = scmp.ne.s32.totalorder %s32, %s35
      %p41 = scmp.eq.s32.totalorder %s22, 0
      %p42 = por %p40, %p41
      %p43 = scmp.ne.s32.totalorder %s32, %s35
      %p44 = scmp.eq.s32.totalorder %s27, 1
      %p45 = por %p43, %p44
      %p46 = scmp.ne.s32.totalorder %s35, %s36
      %p47 = scmp.eq.s32.totalorder %s27, 0
      %p48 = por %p46, %p47
      %p49 = scmp.ne.s32.totalorder %s35, %s36
      %p50 = scmp.eq.s32.totalorder %s28, 1
      %p51 = por %p49, %p50
      %p53 = scmp.ne.s32.totalorder %s36, %s52
      %p54 = scmp.eq.s32.totalorder %s28, 0
      %p55 = por %p53, %p54
      %s57 = sadd.s32 %s56, 1
      %p60 = scmp.eq.s32.totalorder %s22, 1
      %p61 = scmp.ne.s32.totalorder %s56, %s58
      %p62 = scmp.eq.s32.totalorder %s22, 0
      %p63 = por %p61, %p62
      %p64 = scmp.ne.s32.totalorder %s56, %s58
      %p65 = scmp.eq.s32.totalorder %s27, 1
      %p66 = por %p64, %p65
      %p67 = scmp.ne.s32.totalorder %s58, %s59
      %p68 = scmp.eq.s32.totalorder %s27, 0
      %p69 = por %p67, %p68
      %p70 = scmp.ne.s32.totalorder %s58, %s59
      %p71 = scmp.eq.s32.totalorder %s28, 1
      %p72 = por %p70, %p71
      %p74 = scmp.ne.s32.totalorder %s59, %s73
      %p75 = scmp.eq.s32.totalorder %s28, 0
      %p76 = por %p74, %p75
      %s78 = sadd.s32 %s77, 1
      %p81 = scmp.eq.s32.totalorder %s22, 1
      %p82 = scmp.ne.s32.totalorder %s77, %s79
      %p83 = scmp.eq.s32.totalorder %s22, 0
      %p84 = por %p82, %p83
      %p85 = scmp.ne.s32.totalorder %s77, %s79
      %p86 = scmp.eq.s32.totalorder %s27, 1
      %p87 = por %p85, %p86
      %p88 = scmp.ne.s32.totalorder %s79, %s80
      %p89 = scmp.eq.s32.totalorder %s27, 0
      %p90 = por %p88, %p89
      %p91 = scmp.ne.s32.totalorder %s79, %s80
      %p92 = scmp.eq.s32.totalorder %s28, 1
      %p93 = por %p91, %p92
      %p95 = scmp.ne.s32.totalorder %s80, %s94
      %p96 = scmp.eq.s32.totalorder %s28, 0
      %p97 = por %p95, %p96
      %s99 = sadd.s32 %s98, 1
      %p102 = scmp.eq.s32.totalorder %s22, 1
      %p103 = scmp.ne.s32.totalorder %s98, %s100
      %p104 = scmp.eq.s32.totalorder %s22, 0
      %p105 = por %p103, %p104
      %p106 = scmp.ne.s32.totalorder %s98, %s100
      %p107 = scmp.eq.s32.totalorder %s27, 1
      %p108 = por %p106, %p107
      %p109 = scmp.ne.s32.totalorder %s100, %s101
      %p110 = scmp.eq.s32.totalorder %s27, 0
      %p111 = por %p109, %p110
      %p112 = scmp.ne.s32.totalorder %s100, %s101
      %p113 = scmp.eq.s32.totalorder %s28, 1
      %p114 = por %p112, %p113
      %p116 = scmp.ne.s32.totalorder %s101, %s115
      %p117 = scmp.eq.s32.totalorder %s28, 0
      %p118 = por %p116, %p117
      %s120 = sadd.s32 %s119, 1
      %p123 = scmp.eq.s32.totalorder %s22, 1
      %p124 = scmp.ne.s32.totalorder %s119, %s121
      %p125 = scmp.eq.s32.totalorder %s22, 0
      %p126 = por %p124, %p125
      %p127 = scmp.ne.s32.totalorder %s119, %s121
      %p128 = scmp.eq.s32.totalorder %s27, 1
      %p129 = por %p127, %p128
      %p130 = scmp.ne.s32.totalorder %s121, %s122
      %p131 = scmp.eq.s32.totalorder %s27, 0
      %p132 = por %p130, %p131
      %p133 = scmp.ne.s32.totalorder %s121, %s122
      %p134 = scmp.eq.s32.totalorder %s28, 1
      %p135 = por %p133, %p134
      %p137 = scmp.ne.s32.totalorder %s122, %s136
      %p138 = scmp.eq.s32.totalorder %s28, 0
      %p139 = por %p137, %p138
      %s141 = sadd.s32 %s140, 1
      %p144 = scmp.eq.s32.totalorder %s22, 1
      %p145 = scmp.ne.s32.totalorder %s140, %s142
      %p146 = scmp.eq.s32.totalorder %s22, 0
      %p147 = por %p145, %p146
      %p148 = scmp.ne.s32.totalorder %s140, %s142
      %p149 = scmp.eq.s32.totalorder %s27, 1
      %p150 = por %p148, %p149
      %p151 = scmp.ne.s32.totalorder %s142, %s143
      %p152 = scmp.eq.s32.totalorder %s27, 0
      %p153 = por %p151, %p152
      %p154 = scmp.ne.s32.totalorder %s142, %s143
      %p155 = scmp.eq.s32.totalorder %s28, 1
      %p156 = por %p154, %p155
      %p158 = scmp.ne.s32.totalorder %s143, %s157
      %p159 = scmp.eq.s32.totalorder %s28, 0
      %p160 = por %p158, %p159
      %s162 = sadd.s32 %s161, 1
      %p165 = scmp.eq.s32.totalorder %s22, 1
      %p166 = scmp.ne.s32.totalorder %s161, %s163
      %p167 = scmp.eq.s32.totalorder %s22, 0
      %p168 = por %p166, %p167
      %p169 = scmp.ne.s32.totalorder %s161, %s163
      %p170 = scmp.eq.s32.totalorder %s27, 1
      %p171 = por %p169, %p170
      %p172 = scmp.ne.s32.totalorder %s163, %s164
      %p173 = scmp.eq.s32.totalorder %s27, 0
      %p174 = por %p172, %p173
      %p175 = scmp.ne.s32.totalorder %s163, %s164
      %p176 = scmp.eq.s32.totalorder %s28, 1
      %p177 = por %p175, %p176
      %p179 = scmp.ne.s32.totalorder %s164, %s178
      %p180 = scmp.eq.s32.totalorder %s28, 0
      %p181 = por %p179, %p180
      %s182 = ssub.s32 %s22, %s29
      %p183 = scmp.eq.s32.totalorder %s182, 0
      %s185 = sadd.s32 %s184, 1
      %s186 = scalar_select %p183, %s184, %s185
      %p189 = pneg %p183
      %p190 = scmp.eq.s32.totalorder %s22, 1
      %p191 = por %p189, %p190
      %p192 = scmp.ne.s32.totalorder %s184, %s187
      %p193 = scmp.eq.s32.totalorder %s22, 0
      %p194 = por %p192, %p193
      %p195 = scmp.ne.s32.totalorder %s184, %s187
      %p196 = scmp.eq.s32.totalorder %s27, 1
      %p197 = por %p195, %p196
      %p198 = scmp.ne.s32.totalorder %s187, %s188
      %p199 = scmp.eq.s32.totalorder %s27, 0
      %p200 = por %p198, %p199
      %p201 = scmp.ne.s32.totalorder %s187, %s188
      %p202 = scmp.eq.s32.totalorder %s28, 1
      %p203 = por %p201, %p202
      %p205 = scmp.ne.s32.totalorder %s188, %s204
      %p206 = scmp.eq.s32.totalorder %s28, 0
      %p207 = por %p205, %p206
      %s208 = ssub.s32 %s22, %s29
      %p209 = scmp.eq.s32.totalorder %s208, 0
      %s211 = sadd.s32 %s210, 1
      %s212 = scalar_select %p209, %s210, %s211
      %p215 = pneg %p209
      %p216 = scmp.eq.s32.totalorder %s22, 1
      %p217 = por %p215, %p216
      %p218 = scmp.ne.s32.totalorder %s210, %s213
      %p219 = scmp.eq.s32.totalorder %s22, 0
      %p220 = por %p218, %p219
      %p221 = scmp.ne.s32.totalorder %s210, %s213
      %p222 = scmp.eq.s32.totalorder %s27, 1
      %p223 = por %p221, %p222
      %p224 = scmp.ne.s32.totalorder %s213, %s214
      %p225 = scmp.eq.s32.totalorder %s27, 0
      %p226 = por %p224, %p225
      %p227 = scmp.ne.s32.totalorder %s213, %s214
      %p228 = scmp.eq.s32.totalorder %s28, 1
      %p229 = por %p227, %p228
      %p231 = scmp.ne.s32.totalorder %s214, %s230
      %p232 = scmp.eq.s32.totalorder %s28, 0
      %p233 = por %p231, %p232
      %p234 = scmp.le.s32.totalorder 1, %s22
      %p235 = scmp.lt.s32.totalorder %s22, 3
      %p236 = pnand %p234, %p235
      %p237 = pneg %p236
      // Predicated region
      $region9: #{tpu_custom_call.1} parent=5 // pred_check
        _
      $region10: #{tpu_custom_call.1} parent=5 // pred_check_branch
        %239 = sbr.rel (%p236) target = $region12
      $region11: #{tpu_custom_call.1} parent=5 // pred_region
        %s240 = ssub.s32 %s22, 1
        // Predicated region
        $region13: #{tpu_custom_call.1} parent=11 // pred_check
          %p241 = pneg %p69
        $region14: #{tpu_custom_call.1} parent=11 // pred_check_branch
          %243 = sbr.rel (%p241) target = $region16
        $region15: #{tpu_custom_call.1} parent=11 // pred_region
          _
        $region16: #{tpu_custom_call.1} parent=11 // pred_fallthru
          _
        // Predicated region
        $region17: #{tpu_custom_call.1} parent=11 // pred_check
          %p244 = pneg %p90
        $region18: #{tpu_custom_call.1} parent=11 // pred_check_branch
          %246 = sbr.rel (%p244) target = $region20
        $region19: #{tpu_custom_call.1} parent=11 // pred_region
          _
        $region20: #{tpu_custom_call.1} parent=11 // pred_fallthru
          _
        // Predicated region
        $region21: #{tpu_custom_call.1} parent=11 // pred_check
          %p247 = pneg %p111
        $region22: #{tpu_custom_call.1} parent=11 // pred_check_branch
          %249 = sbr.rel (%p247) target = $region24
        $region23: #{tpu_custom_call.1} parent=11 // pred_region
          %251 = vsyncadd [#allocation3], 0
          %s252 = sshll.u32 %s3, 4
          %s253 = int_to_ptr.hbm [resolvable:$true] %s252
          %s254 = sshll.u32 [#allocation2], 4
          %s255 = int_to_ptr.vmem [resolvable:$true] %s254
          %260 = dma.hbm_to_vmem [thread:$0]  %s253, 256, %s255, [#allocation3], 64, 64, 4
        $region24: #{tpu_custom_call.1} parent=11 // pred_fallthru
          _
        // Predicated region
        $region25: #{tpu_custom_call.1} parent=11 // pred_check
          %p261 = pneg %p132
        $region26: #{tpu_custom_call.1} parent=11 // pred_check_branch
          %263 = sbr.rel (%p261) target = $region28
        $region27: #{tpu_custom_call.1} parent=11 // pred_region
          _
        $region28: #{tpu_custom_call.1} parent=11 // pred_fallthru
          _
        // Predicated region
        $region29: #{tpu_custom_call.1} parent=11 // pred_check
          %p264 = pneg %p153
        $region30: #{tpu_custom_call.1} parent=11 // pred_check_branch
          %266 = sbr.rel (%p264) target = $region32
        $region31: #{tpu_custom_call.1} parent=11 // pred_region
          _
        $region32: #{tpu_custom_call.1} parent=11 // pred_fallthru
          _
        // Predicated region
        $region33: #{tpu_custom_call.1} parent=11 // pred_check
          %p267 = pneg %p174
        $region34: #{tpu_custom_call.1} parent=11 // pred_check_branch
          %269 = sbr.rel (%p267) target = $region36
        $region35: #{tpu_custom_call.1} parent=11 // pred_region
          _
        $region36: #{tpu_custom_call.1} parent=11 // pred_fallthru
          _
      $region12: #{tpu_custom_call.1} parent=5 // pred_fallthru
        _
      %p270 = scmp.lt.s32.totalorder %s22, 2
      // Predicated region
      $region37: #{tpu_custom_call.1} parent=5 // pred_check
        %p271 = pneg %p270
      $region38: #{tpu_custom_call.1} parent=5 // pred_check_branch
        %273 = sbr.rel (%p271) target = $region40
      $region39: #{tpu_custom_call.1} parent=5 // pred_region
        // Predicated region
        $region41: #{tpu_custom_call.1} parent=39 // pred_check
          %p274 = pneg %p42
        $region42: #{tpu_custom_call.1} parent=39 // pred_check_branch
          %276 = sbr.rel (%p274) target = $region44
        $region43: #{tpu_custom_call.1} parent=39 // pred_region
          %s277 = smul.u32 3, %s22
          %s278 = ssub.s32 5, %s277
          %p279 = scmp.lt.s32.totalorder %s278, 3
          %s280 = scalar_select %p279, %s278, 3
          %s281 = smul.u32 8, %s280
          %p282 = scmp.lt.s32.totalorder %s277, 4
          %s283 = scalar_select %p282, %s277, 4
          %s284 = smul.addr %s283, 8
          %s285 = scalar_lea.vmem %s0, %s284
          %s286 = smul.u32 3, %s22
          %s287 = ssub.s32 5, %s286
          %p288 = scmp.lt.s32.totalorder %s287, 3
          %s289 = scalar_select %p288, %s287, 3
          %s290 = smul.u32 8, %s289
        $region44: #{tpu_custom_call.1} parent=39 // pred_fallthru
          _
      $region40: #{tpu_custom_call.1} parent=5 // pred_fallthru
        _
      %p291 = scmp.le.s32.totalorder 1, %s22
      %p292 = scmp.lt.s32.totalorder %s22, 3
      %p293 = pnand %p291, %p292
      %p294 = pneg %p293
      // Predicated region
      $region45: #{tpu_custom_call.1} parent=5 // pred_check
        _
      $region46: #{tpu_custom_call.1} parent=5 // pred_check_branch
        %296 = sbr.rel (%p293) target = $region48
      $region47: #{tpu_custom_call.1} parent=5 // pred_region
        %s297 = ssub.s32 %s22, 1
        // Predicated region
        $region49: #{tpu_custom_call.1} parent=47 // pred_check
          %p298 = pneg %p111
        $region50: #{tpu_custom_call.1} parent=47 // pred_check_branch
          %300 = sbr.rel (%p298) target = $region52
        $region51: #{tpu_custom_call.1} parent=47 // pred_region
          %302 = dma.done [#allocation3], 256
        $region52: #{tpu_custom_call.1} parent=47 // pred_fallthru
          _
        %s303 = smul.u32 3, %s27
        %s304 = ssub.s32 5, %s303
        %p305 = scmp.lt.s32.totalorder %s304, 3
        %s306 = scalar_select %p305, %s304, 3
        %s307 = smul.u32 8, %s306
        %p308 = scmp.lt.s32.totalorder %s303, 4
        %s309 = scalar_select %p308, %s303, 4
        %s310 = smul.addr %s309, 8
        %s311 = scalar_lea.vmem %s0, %s310
        %p312 = pneg %p48
        %p313 = pneg %p45
        %p314 = pneg %p69
        %p315 = pneg %p66
        %p316 = pneg %p90
        %p317 = pneg %p87
        %p318 = pneg %p111
        %p319 = pneg %p108
        %p320 = pneg %p132
        %p321 = pneg %p129
        %p322 = pneg %p153
        %p323 = pneg %p150
        %p324 = pneg %p174
        %p325 = pneg %p171
        %p326 = pneg %p200
        %p327 = pneg %p197
        %s328 = sand.u32 %s187, 1
        %s329 = scalar_lea.sflag [#allocation4], %s328
        %s330 = sand.u32 %s187, 1
        %s331 = smul.addr %s330, 12
        %s332 = scalar_lea.vmem [#allocation5], %s331
        %p333 = pneg %p226
        %p334 = pneg %p223
        %s335 = sand.u32 %s213, 1
        %s336 = scalar_lea.sflag [#allocation7], %s335
        %s337 = sand.u32 %s213, 1
        %s338 = smul.addr %s337, 12
        %s339 = scalar_lea.vmem [#allocation6], %s338
        %s340 = smul.u32 3, %s27
        %s341 = ssub.s32 5, %s340
        %p342 = scmp.lt.s32.totalorder %s341, 3
        %s343 = scalar_select %p342, %s341, 3
        %s344 = smul.u32 8, %s343
        %p345 = scmp.lt.s32.totalorder %s340, 4
        %s346 = scalar_select %p345, %s340, 4
        %s347 = smul.addr %s346, 8
        %s348 = scalar_lea.vmem %s0, %s347
        %s349 = smul.u32 3, %s27
        %s350 = ssub.s32 5, %s349
        %p351 = scmp.lt.s32.totalorder %s350, 3
        %s352 = scalar_select %p351, %s350, 3
        %s353 = smul.u32 8, %s352
        %s354 = smul.u32 3, %s27
        %s355 = ssub.s32 5, %s354
        %p356 = scmp.lt.s32.totalorder %s355, 3
        %s357 = scalar_select %p356, %s355, 3
        %s358 = smul.u32 4, %s357
        %s359 = smul.u32 3, %s27
        %s360 = ssub.s32 5, %s359
        %p361 = scmp.lt.s32.totalorder %s360, 3
        %s362 = scalar_select %p361, %s360, 3
        %s363 = smul.u32 4, %s362
        %v365 = vld [vmem:[%s348] sm:$0xff]
        %v366 = vld [vmem:[%s348 + $0x8] sm:$0xff]
        %v367 = vld [vmem:[%s348 + $0x10] sm:$0xff]
        %vm368 = vcmask 261120
        %v369 = vsel %vm368, %v365, 0.0
        %370 = vadd.xlane.f32.xlu0 %v369
        %v371 = vpop.xlane.xlu0 %370
        %v372 = vsel %vm368, %v366, 0.0
        %373 = vadd.xlane.f32.xlu0 %v372
        %v374 = vpop.xlane.xlu0 %373
        %v375 = vsel %vm368, %v367, 0.0
        %376 = vadd.xlane.f32.xlu0 %v375
        %v377 = vpop.xlane.xlu0 %376
        %v378 = vrcp.pop 32.0
        %v379 = vmul.f32 32.0, %v378
        %v380 = vsub.f32 1.0, %v379
        %v381 = vmul.f32 %v378, %v380
        %v382 = vadd.f32 %v378, %v381
        %vm383 = vweird.f32 %v378
        %v384 = vsel %vm383, %v378, %v382
        %v385 = vmul.f32 %v371, %v384
        %v386 = vmul.f32 %v374, %v384
        %v387 = vmul.f32 %v377, %v384
        %v388 = vmul.f32 %v365, %v365
        %v389 = vmul.f32 %v366, %v366
        %v390 = vmul.f32 %v367, %v367
        %v391 = vsel %vm368, %v388, 0.0
        %392 = vadd.xlane.f32.xlu0 %v391
        %v393 = vpop.xlane.xlu0 %392
        %v394 = vsel %vm368, %v389, 0.0
        %395 = vadd.xlane.f32.xlu0 %v394
        %v396 = vpop.xlane.xlu0 %395
        %v397 = vsel %vm368, %v390, 0.0
        %398 = vadd.xlane.f32.xlu0 %v397
        %v399 = vpop.xlane.xlu0 %398
        %v400 = vmul.f32 %v393, %v384
        %v401 = vmul.f32 %v396, %v384
        %v402 = vmul.f32 %v399, %v384
        %v403 = vmul.f32 %v385, %v385
        %v404 = vmul.f32 %v386, %v386
        %v405 = vmul.f32 %v387, %v387
        %v406 = vsub.f32 %v400, %v403
        %v407 = vsub.f32 %v401, %v404
        %v408 = vsub.f32 %v402, %v405
        %v409 = vmax.f32 %v406, 0.0
        %v410 = vmax.f32 %v407, 0.0
        %v411 = vmax.f32 %v408, 0.0
        %v412 = vsub.f32 %v365, %v385
        %v413 = vsub.f32 %v366, %v386
        %v414 = vsub.f32 %v367, %v387
        %v415 = vadd.f32 %v409, 1e-05
        %v416 = vadd.f32 %v410, 1e-05
        %v417 = vadd.f32 %v411, 1e-05
        %v418 = vrsqrt.pop %v415
        %v419 = vmul.f32 %v418, %v415
        %v420 = vmul.f32 %v419, %v418
        %v421 = vmul.f32 0.5, %v420
        %v422 = vsub.f32 1.5, %v421
        %v423 = vmul.f32 %v418, %v422
        %vm424 = vweird.f32 %v415
        %vm425 = vweird.f32 %v418
        %vm426 = vmor %vm424, %vm425
        %v427 = vsel %vm426, %v418, %v423
        %v428 = vrsqrt.pop %v416
        %v429 = vmul.f32 %v428, %v416
        %v430 = vmul.f32 %v429, %v428
        %v431 = vmul.f32 0.5, %v430
        %v432 = vsub.f32 1.5, %v431
        %v433 = vmul.f32 %v428, %v432
        %vm434 = vweird.f32 %v416
        %vm435 = vweird.f32 %v428
        %vm436 = vmor %vm434, %vm435
        %v437 = vsel %vm436, %v428, %v433
        %v438 = vrsqrt.pop %v417
        %v439 = vmul.f32 %v438, %v417
        %v440 = vmul.f32 %v439, %v438
        %v441 = vmul.f32 0.5, %v440
        %v442 = vsub.f32 1.5, %v441
        %v443 = vmul.f32 %v438, %v442
        %vm444 = vweird.f32 %v417
        %vm445 = vweird.f32 %v438
        %vm446 = vmor %vm444, %vm445
        %v447 = vsel %vm446, %v438, %v443
        %v448 = vmul.f32 %v412, %v427
        %v449 = vmul.f32 %v413, %v437
        %v450 = vmul.f32 %v414, %v447
        %v451 = vld [vmem:[%s1] sm:$0x1]
        %v453 = vperm.slane %v451, 0
        %v455 = vmul.f32 %v448, %v453
        %v456 = vmul.f32 %v449, %v453
        %v457 = vmul.f32 %v450, %v453
        %v458 = vld [vmem:[%s2] sm:$0x1]
        %v460 = vperm.slane %v458, 0
        %v462 = vadd.f32 %v455, %v460
        %v463 = vadd.f32 %v456, %v460
        %v464 = vadd.f32 %v457, %v460
        %v465 = vpack.c.bf16 %v463, %v462
        %v466 = vpack.c.bf16 %v464, %v464
        %v467 = vld [vmem:[#allocation2] sm:$0xf]
        %v468 = vld [vmem:[#allocation2 + $0x4] sm:$0xf]
        %v469 = vld [vmem:[#allocation2 + $0x8] sm:$0xf]
        %v470 = vld [vmem:[#allocation2 + $0xc] sm:$0xf]
        %v471 = vld [vmem:[%s4] sm:$0x1]
        %v473 = vperm.slane %v471, 0
        %v479 = vunpack.c.l.b16 %v467
        %v480 = vunpack.c.l.b16 %v468
        %v481 = vunpack.c.l.b16 %v469
        %v482 = vunpack.c.l.b16 %v470
        %v483 = vpack.c.b16 %v480, %v479
        %v484 = vpack.c.b16 %v482, %v481
        %v488 = vsel %vm368, %v465, 0
        %v491 = vsel %vm368, %v466, 0
        %493 = vmatpush.bf16.msra.mxu0 0
        %494 = vmatpush.bf16.msra.mxu0 0
        %495 = vmatpush.bf16.msra.mxu0 0
        %496 = vmatpush.bf16.msra.mxu0 0
        %497 = vmatpush.bf16.msra.mxu0 0
        %498 = vmatpush.bf16.msra.mxu0 0
        %499 = vmatpush.bf16.msra.mxu0 %v484
        %500 = vmatpush.bf16.msra.mxu0 %v483
        %501 = vmatmul.bf16.gmra.mxu0 %v488
        %v502 = vpop.f32.mrf.mxu0
        %v503 = vadd.f32 %v473, %v502
        %v504 = vpop.f32.mrf.mxu0
        %v505 = vadd.f32 %v473, %v504
        %506 = vmatmul.bf16.gmra.mxu0 %v491
        %v507 = vpop.f32.mrf.mxu0
        %v508 = vadd.f32 %v473, %v507
        %v509 = vpop.f32.mrf.mxu0
        %510 = vdwg.mxu0
        %v511 = vpack.c.bf16 %v505, %v503
        %v512 = vpack.c.bf16 %v508, %v508
        %v513 = vld [vmem:[%s5] sm:$0xff]
        %v514 = vld [vmem:[%s5 + $0x8] sm:$0xff]
        %v515 = vld [vmem:[%s5 + $0x10] sm:$0xff]
        %v516 = vld [vmem:[%s5 + $0x18] sm:$0xff]
        %v517 = vld [vmem:[%s5 + $0x20] sm:$0xff]
        %v518 = vld [vmem:[%s5 + $0x28] sm:$0xff]
        %v519 = vld [vmem:[%s5 + $0x30] sm:$0xff]
        %v520 = vld [vmem:[%s5 + $0x38] sm:$0xff]
        %v521 = vld [vmem:[%s6] sm:$0x3]
        %v523 = vperm.slane %v521, 0
        %v524 = vperm.slane %v521, 1
        %v535 = vunpack.c.l.b16 %v513
        %v536 = vunpack.c.h.b16 %v513
        %v537 = vunpack.c.l.b16 %v514
        %v538 = vunpack.c.h.b16 %v514
        %v539 = vunpack.c.l.b16 %v515
        %v540 = vunpack.c.h.b16 %v515
        %v541 = vunpack.c.l.b16 %v516
        %v542 = vunpack.c.h.b16 %v516
        %v543 = vunpack.c.l.b16 %v517
        %v544 = vunpack.c.h.b16 %v517
        %v545 = vunpack.c.l.b16 %v518
        %v546 = vunpack.c.h.b16 %v518
        %v547 = vunpack.c.l.b16 %v519
        %v548 = vunpack.c.h.b16 %v519
        %v549 = vunpack.c.l.b16 %v520
        %v550 = vunpack.c.h.b16 %v520
        %v551 = vpack.c.b16 %v537, %v535
        %v552 = vpack.c.b16 %v538, %v536
        %v553 = vpack.c.b16 %v541, %v539
        %v554 = vpack.c.b16 %v542, %v540
        %v555 = vpack.c.b16 %v545, %v543
        %v556 = vpack.c.b16 %v546, %v544
        %v557 = vpack.c.b16 %v549, %v547
        %v558 = vpack.c.b16 %v550, %v548
        %vm567 = vcmask 523264
        %v569 = vsel %vm567, %v511, 0
        %v572 = vsel %vm567, %v512, 0
        %574 = vmatpush.bf16.msra.mxu0 0
        %575 = vmatpush.bf16.msra.mxu0 0
        %576 = vmatpush.bf16.msra.mxu0 0
        %577 = vmatpush.bf16.msra.mxu0 0
        %578 = vmatpush.bf16.msra.mxu0 %v557
        %579 = vmatpush.bf16.msra.mxu0 %v555
        %580 = vmatpush.bf16.msra.mxu0 %v553
        %581 = vmatpush.bf16.msra.mxu0 %v551
        %582 = vmatmul.bf16.gmra.mxu0 %v569
        %v583 = vpop.f32.mrf.mxu0
        %v584 = vadd.f32 %v523, %v583
        %v585 = vpop.f32.mrf.mxu0
        %v586 = vadd.f32 %v523, %v585
        %587 = vmatmul.bf16.gmra.mxu0 %v572
        %v588 = vpop.f32.mrf.mxu0
        %v589 = vadd.f32 %v523, %v588
        %v590 = vpop.f32.mrf.mxu0
        %591 = vdwg.mxu0
        %592 = vmatpush.bf16.msra.mxu0 0
        %593 = vmatpush.bf16.msra.mxu0 0
        %594 = vmatpush.bf16.msra.mxu0 0
        %595 = vmatpush.bf16.msra.mxu0 0
        %596 = vmatpush.bf16.msra.mxu0 %v558
        %597 = vmatpush.bf16.msra.mxu0 %v556
        %598 = vmatpush.bf16.msra.mxu0 %v554
        %599 = vmatpush.bf16.msra.mxu0 %v552
        %600 = vmatmul.bf16.gmra.mxu0 %v569
        %v601 = vpop.f32.mrf.mxu0
        %v602 = vadd.f32 %v524, %v601
        %v603 = vpop.f32.mrf.mxu0
        %v604 = vadd.f32 %v524, %v603
        %605 = vmatmul.bf16.gmra.mxu0 %v572
        %v606 = vpop.f32.mrf.mxu0
        %v607 = vadd.f32 %v524, %v606
        %v608 = vpop.f32.mrf.mxu0
        %609 = vdwg.mxu0
        %v610 = vpack.c.bf16 %v584, %v584
        %v611 = vpack.c.bf16 %v586, %v586
        %v612 = vpack.c.bf16 %v589, %v589
        %613 = vst [vmem:[%s332] sm:$0xf] %v610
        %614 = vst [vmem:[%s332 + $0x4] sm:$0xf] %v611
        %615 = vst [vmem:[%s332 + $0x8] sm:$0xf] %v612
        %v616 = vpack.c.bf16 %v602, %v602
        %v617 = vpack.c.bf16 %v604, %v604
        %v618 = vpack.c.bf16 %v607, %v607
        %619 = vst [vmem:[%s339] sm:$0xf] %v616
        %620 = vst [vmem:[%s339 + $0x4] sm:$0xf] %v617
        %621 = vst [vmem:[%s339 + $0x8] sm:$0xf] %v618
        %s622 = sand.u32 %s187, 1
        %s623 = scalar_lea.sflag [#allocation4], %s622
        %s624 = sand.u32 %s187, 1
        %s625 = smul.addr %s624, 12
        %s626 = scalar_lea.vmem [#allocation5], %s625
        %s627 = sand.u32 %s213, 1
        %s628 = scalar_lea.sflag [#allocation7], %s627
        %s629 = sand.u32 %s213, 1
        %s630 = smul.addr %s629, 12
        %s631 = scalar_lea.vmem [#allocation6], %s630
        // Predicated region
        $region53: #{tpu_custom_call.1} parent=47 // pred_check
          %p632 = pneg %p197
        $region54: #{tpu_custom_call.1} parent=47 // pred_check_branch
          %634 = sbr.rel (%p632) target = $region56
        $region55: #{tpu_custom_call.1} parent=47 // pred_region
          %s635 = smul.u32 3, %s27
          %s636 = ssub.s32 5, %s635
          %p637 = scmp.lt.s32.totalorder %s636, 3
          %s638 = scalar_select %p637, %s636, 3
          %s639 = smul.u32 4, %s638
          %s640 = ssub.s32 12, %s639
          %s641 = sshll.u32 %s640, 4
          %642 = vsyncadd %s623, %s641
          %p643 = scmp.ne.s32.totalorder 0, %s639
          %s644 = smul.addr %s635, 4
          %s645 = scalar_lea.hbm %s7, %s644
          %s646 = smul.u32 4, %s638
          %s647 = sshll.u32 %s626, 4
          %s648 = int_to_ptr.vmem [resolvable:$true] %s647
          %s649 = sshll.u32 %s645, 4
          %s650 = int_to_ptr.hbm [resolvable:$true] %s649
          %s651 = sshll.u32 %s646, 4
          %655 = dma.vmem_to_hbm [thread:$0]  (%p643), %s648, %s651, %s650, %s623, 64, 64, 4
        $region56: #{tpu_custom_call.1} parent=47 // pred_fallthru
          _
        // Predicated region
        $region57: #{tpu_custom_call.1} parent=47 // pred_check
          %p656 = pneg %p223
        $region58: #{tpu_custom_call.1} parent=47 // pred_check_branch
          %658 = sbr.rel (%p656) target = $region60
        $region59: #{tpu_custom_call.1} parent=47 // pred_region
          %s659 = smul.u32 3, %s27
          %s660 = ssub.s32 5, %s659
          %p661 = scmp.lt.s32.totalorder %s660, 3
          %s662 = scalar_select %p661, %s660, 3
          %s663 = smul.u32 4, %s662
          %s664 = ssub.s32 12, %s663
          %s665 = sshll.u32 %s664, 4
          %666 = vsyncadd %s628, %s665
          %p667 = scmp.ne.s32.totalorder 0, %s663
          %s668 = smul.addr %s659, 4
          %s669 = scalar_lea.hbm %s8, %s668
          %s670 = smul.u32 4, %s662
          %s671 = sshll.u32 %s631, 4
          %s672 = int_to_ptr.vmem [resolvable:$true] %s671
          %s673 = sshll.u32 %s669, 4
          %s674 = int_to_ptr.hbm [resolvable:$true] %s673
          %s675 = sshll.u32 %s670, 4
          %679 = dma.vmem_to_hbm [thread:$0]  (%p667), %s672, %s675, %s674, %s628, 64, 64, 4
        $region60: #{tpu_custom_call.1} parent=47 // pred_fallthru
          _
      $region48: #{tpu_custom_call.1} parent=5 // pred_fallthru
        _
      %p680 = scmp.le.s32.totalorder 2, %s22
      // Predicated region
      $region61: #{tpu_custom_call.1} parent=5 // pred_check
        %p681 = pneg %p680
      $region62: #{tpu_custom_call.1} parent=5 // pred_check_branch
        %683 = sbr.rel (%p681) target = $region64
      $region63: #{tpu_custom_call.1} parent=5 // pred_region
        %s684 = ssub.s32 %s22, 2
        // Predicated region
        $region65: #{tpu_custom_call.1} parent=63 // pred_check
          %p685 = pneg %p203
        $region66: #{tpu_custom_call.1} parent=63 // pred_check_branch
          %687 = sbr.rel (%p685) target = $region68
        $region67: #{tpu_custom_call.1} parent=63 // pred_region
          %s688 = sand.u32 %s188, 1
          %s689 = scalar_lea.sflag [#allocation4], %s688
          %s690 = sand.u32 %s188, 1
          %s691 = smul.addr %s690, 12
          %s692 = scalar_lea.vmem [#allocation5], %s691
          %694 = dma.done %s689, 192
        $region68: #{tpu_custom_call.1} parent=63 // pred_fallthru
          _
        // Predicated region
        $region69: #{tpu_custom_call.1} parent=63 // pred_check
          %p695 = pneg %p229
        $region70: #{tpu_custom_call.1} parent=63 // pred_check_branch
          %697 = sbr.rel (%p695) target = $region72
        $region71: #{tpu_custom_call.1} parent=63 // pred_region
          %s698 = sand.u32 %s214, 1
          %s699 = scalar_lea.sflag [#allocation7], %s698
          %s700 = sand.u32 %s214, 1
          %s701 = smul.addr %s700, 12
          %s702 = scalar_lea.vmem [#allocation6], %s701
          %704 = dma.done %s699, 192
        $region72: #{tpu_custom_call.1} parent=63 // pred_fallthru
          _
      $region64: #{tpu_custom_call.1} parent=5 // pred_fallthru
        _
    $region6: #{tpu_custom_call.1} parent=1 // loop_footer
      %s26 = sadd.s32 1, %s22
    $region7: #{tpu_custom_call.1} parent=1 // loop_footer_branch
      %21 = sbr.rel target = $region3
    $region8: #{tpu_custom_call.1} parent=1 // loop_exit
      _
    %705 = vsyncpa [#allocation3], 1
    %s706 = scalar_lea.sflag [#allocation3], 1
    %707 = vsyncpa %s706, 1
    %708 = vsyncpa [#allocation4], 1
    %s709 = scalar_lea.sflag [#allocation4], 1
    %710 = vsyncpa %s709, 1
    %711 = vsyncpa [#allocation7], 1
    %s712 = scalar_lea.sflag [#allocation7], 1
    %713 = vsyncpa %s712, 1

</llo_original>
